<compile_context>
chip_gen: v7x
topology: tpu7x:2x2x1
jax: 0.10.0
libtpu: 0.0.40
codegen_flags: <defaults>
</compile_context>

<pallas_src>
import functools
import math

import jax
import jax.numpy as jnp
from jax.experimental import pallas as pl
from jax.experimental.pallas import tpu as pltpu

_MASK_VALUE = -1e30          # large finite negative: avoids -inf - -inf NaN in online softmax
_VMEM_LIMIT = 48 * 1024 * 1024  # raise v5e's 16 MiB scoped default; ~25% headroom on v7x (64 MiB)


def _tile(dim: int, target: int, align: int) -> int:
    """Largest block size <= target that is a multiple of `align` and divides `dim`;
    falls back to the full dimension (always a legal Mosaic block)."""
    if dim <= target:
        return dim
    t = (target // align) * align
    while t >= align:
        if dim % t == 0:
            return t
        t -= align
    return dim


def _head_group(n_heads: int, head_dim: int) -> int:
    """Smallest number of heads whose packed lane width is 128-aligned (or all heads,
    in which case the width equals d_model and is a legal full-dim block)."""
    for g in range(1, n_heads + 1):
        if n_heads % g == 0 and (g * head_dim) % 128 == 0:
            return g
    return n_heads


def _cparams(dims):
    return pltpu.CompilerParams(dimension_semantics=dims, vmem_limit_bytes=_VMEM_LIMIT)


# ----------------------- Fused QKV projection: (q,k,v) = clip(x @ w_* + b_*) -----------------------

def _qkv_kernel(x_ref, wq_ref, wk_ref, wv_ref, bq_ref, bk_ref, bv_ref,
                q_ref, k_ref, v_ref, accq, acck, accv, *, clip):
    kstep = pl.program_id(2)

    @pl.when(kstep == 0)
    def _init():
        accq[...] = jnp.zeros_like(accq)
        acck[...] = jnp.zeros_like(acck)
        accv[...] = jnp.zeros_like(accv)

    x = x_ref[...]  # shared x tile feeds all three matmuls (x DMA'd once per grid step)
    accq[...] += jnp.dot(x, wq_ref[...], preferred_element_type=jnp.float32)
    acck[...] += jnp.dot(x, wk_ref[...], preferred_element_type=jnp.float32)
    accv[...] += jnp.dot(x, wv_ref[...], preferred_element_type=jnp.float32)

    @pl.when(kstep == pl.num_programs(2) - 1)
    def _finalize():
        def fin(acc, b_ref, o_ref):
            y = acc[...] + b_ref[...].astype(jnp.float32)
            if clip is not None:
                y = jnp.clip(y, -clip, clip)
            o_ref[...] = y.astype(o_ref.dtype)
        fin(accq, bq_ref, q_ref)
        fin(acck, bk_ref, k_ref)
        fin(accv, bv_ref, v_ref)


def pallas_qkv_proj(x2d, w_q, w_k, w_v, b_q, b_k, b_v, clip=None, *,
                    block_m=512, block_n=512, block_k=512):
    M, K = x2d.shape
    K2, N = w_q.shape
    assert K == K2
    tm = _tile(M, block_m, 8)
    tn = _tile(N, block_n, 128)
    tk = _tile(K, block_k, 128)
    grid = (M // tm, N // tn, K // tk)
    nbytes = x2d.dtype.itemsize
    cost = pl.CostEstimate(
        flops=3 * 2 * M * N * K,
        transcendentals=0,
        bytes_accessed=(M * K + 3 * K * N + 3 * M * N + 3 * N) * nbytes,
    )
    w_spec = pl.BlockSpec((tk, tn), lambda i, j, k: (k, j))
    b_spec = pl.BlockSpec((1, tn), lambda i, j, k: (0, j))
    o_spec = pl.BlockSpec((tm, tn), lambda i, j, k: (i, j))
    out_shape = tuple(jax.ShapeDtypeStruct((M, N), x2d.dtype) for _ in range(3))
    return pl.pallas_call(
        functools.partial(_qkv_kernel, clip=clip),
        out_shape=out_shape,
        grid=grid,
        in_specs=[pl.BlockSpec((tm, tk), lambda i, j, k: (i, k)),
                  w_spec, w_spec, w_spec, b_spec, b_spec, b_spec],
        out_specs=(o_spec, o_spec, o_spec),
        scratch_shapes=[pltpu.VMEM((tm, tn), jnp.float32),
                        pltpu.VMEM((tm, tn), jnp.float32),
                        pltpu.VMEM((tm, tn), jnp.float32)],
        compiler_params=_cparams(("parallel", "parallel", "arbitrary")),
        cost_estimate=cost,
    )(x2d, w_q, w_k, w_v, b_q, b_k, b_v)


# ----------------------- Tiled linear (output projection): y = x @ w + b -----------------------

def _linear_kernel(x_ref, w_ref, b_ref, o_ref, acc_ref, *, clip):
    @pl.when(pl.program_id(2) == 0)
    def _init():
        acc_ref[...] = jnp.zeros_like(acc_ref)

    acc_ref[...] += jnp.dot(x_ref[...], w_ref[...], preferred_element_type=jnp.float32)

    @pl.when(pl.program_id(2) == pl.num_programs(2) - 1)
    def _finalize():
        y = acc_ref[...] + b_ref[...].astype(jnp.float32)
        if clip is not None:
            y = jnp.clip(y, -clip, clip)
        o_ref[...] = y.astype(o_ref.dtype)


def pallas_linear(x2d, w, b, clip=None, *, block_m=512, block_n=512, block_k=512):
    M, K = x2d.shape
    K2, N = w.shape
    assert K == K2 and b.shape == (1, N)
    tm = _tile(M, block_m, 8)
    tn = _tile(N, block_n, 128)
    tk = _tile(K, block_k, 128)
    grid = (M // tm, N // tn, K // tk)
    nbytes = x2d.dtype.itemsize
    cost = pl.CostEstimate(
        flops=2 * M * N * K,
        transcendentals=0,
        bytes_accessed=(M * K + K * N + M * N + N) * nbytes,
    )
    return pl.pallas_call(
        functools.partial(_linear_kernel, clip=clip),
        out_shape=jax.ShapeDtypeStruct((M, N), x2d.dtype),
        grid=grid,
        in_specs=[
            pl.BlockSpec((tm, tk), lambda i, j, k: (i, k)),
            pl.BlockSpec((tk, tn), lambda i, j, k: (k, j)),
            pl.BlockSpec((1, tn), lambda i, j, k: (0, j)),
        ],
        out_specs=pl.BlockSpec((tm, tn), lambda i, j, k: (i, j)),
        scratch_shapes=[pltpu.VMEM((tm, tn), jnp.float32)],
        compiler_params=_cparams(("parallel", "parallel", "arbitrary")),
        cost_estimate=cost,
    )(x2d, w, b)


# ----------------------- Flash-style causal attention (head groups on the grid) -----------------------

def _flash_attn_kernel(q_ref, k_ref, v_ref, o_ref, qs_ref, m_ref, l_ref, acc_ref, *,
                       scale, heads_per_group, head_dim, block_q, block_kv):
    qi = pl.program_id(2)
    ki = pl.program_id(3)
    nk = pl.num_programs(3)

    @pl.when(ki == 0)
    def _init():
        # Softmax scale hoisted: applied once per Q block (after clip, so clip semantics hold).
        qs_ref[...] = (q_ref[...].astype(jnp.float32) * scale).astype(qs_ref.dtype)
        m_ref[...] = jnp.full_like(m_ref, _MASK_VALUE)
        l_ref[...] = jnp.zeros_like(l_ref)
        acc_ref[...] = jnp.zeros_like(acc_ref)

    first_row = qi * block_q
    last_row = first_row + (block_q - 1)
    first_col = ki * block_kv
    last_col = first_col + (block_kv - 1)
    contributes = first_col <= last_row          # block has at least one unmasked column
    fully_visible = last_col <= first_row        # block entirely below the diagonal

    def body(apply_mask):
        k_blk = k_ref[...]          # (tkv, group_width)
        v_blk = v_ref[...]
        if apply_mask:
            row = jax.lax.broadcasted_iota(jnp.int32, (block_q, block_kv), 0) + first_row
            col = jax.lax.broadcasted_iota(jnp.int32, (block_q, block_kv), 1) + first_col
            causal = col <= row
        # Small static loop over the heads inside one lane-aligned group (<=2 for hd>=64;
        # only equals n_heads for tiny head_dims where d_model itself is the block width).
        for h in range(heads_per_group):
            sl = slice(h * head_dim, (h + 1) * head_dim)
            s = jax.lax.dot_general(qs_ref[:, sl], k_blk[:, sl],
                                    (((1,), (1,)), ((), ())),
                                    preferred_element_type=jnp.float32)
            if apply_mask:
                s = jnp.where(causal, s, _MASK_VALUE)
            m_prev = m_ref[h]                                      # (tq, 1) f32
            m_new = jnp.maximum(m_prev, jnp.max(s, axis=-1, keepdims=True))
            alpha = jnp.exp(m_prev - m_new)
            p = jnp.exp(s - m_new)                                 # f32 softmax math (v5e-safe)
            l_ref[h] = alpha * l_ref[h] + jnp.sum(p, axis=-1, keepdims=True)
            acc_ref[:, sl] = alpha * acc_ref[:, sl] + jnp.dot(
                p.astype(v_blk.dtype), v_blk[:, sl], preferred_element_type=jnp.float32)
            m_ref[h] = m_new

    # Interior blocks skip the iota/compare/where entirely; only diagonal blocks build the mask.
    @pl.when(jnp.logical_and(contributes, jnp.logical_not(fully_visible)))
    def _diagonal():
        body(True)

    @pl.when(fully_visible)
    def _interior():
        body(False)

    @pl.when(ki == nk - 1)
    def _finalize():
        for h in range(heads_per_group):
            sl = slice(h * head_dim, (h + 1) * head_dim)
            l = l_ref[h]
            inv = pl.reciprocal(l, approx=True)     # EUP slot
            inv = inv * (2.0 - l * inv)             # one Newton step -> ~f32 accuracy
            acc_ref[:, sl] = acc_ref[:, sl] * inv   # normalize in f32 VMEM scratch
        o_ref[...] = acc_ref[...].astype(o_ref.dtype)   # single lane-dense full-width store


def causal_attention(q, k, v, *, n_heads, block_q=512, block_kv=256):
    """q, k, v and the output are (B, T, D) with heads packed along the last dim."""
    B, T, D = q.shape
    hd = D // n_heads
    hg = _head_group(n_heads, hd)      # heads per lane-aligned group
    hgd = hg * hd                      # group lane width (128-aligned or == D)
    n_groups = n_heads // hg
    tq = _tile(T, block_q, 8)
    tkv = _tile(T, block_kv, 8)
    grid = (B, n_groups, T // tq, T // tkv)
    scale = 1.0 / math.sqrt(hd)
    nbytes = q.dtype.itemsize
    cost = pl.CostEstimate(
        flops=2 * B * n_heads * T * T * hd,          # ~half of dense thanks to causal skip
        transcendentals=B * n_heads * T * T // 2,
        bytes_accessed=4 * B * T * D * nbytes,
    )

    def q_map(b, g, qi, ki):
        return (b, qi, g)

    def kv_map(b, g, qi, ki):
        # Clamp: causally-skipped steps reuse the previous block index -> their K/V DMA is skipped.
        last_needed = (qi * tq + tq - 1) // tkv
        return (b, jnp.minimum(ki, last_needed), g)

    q_spec = pl.BlockSpec((None, tq, hgd), q_map)      # resident over ki
    kv_spec = pl.BlockSpec((None, tkv, hgd), kv_map)
    o_spec = pl.BlockSpec((None, tq, hgd), q_map)      # lane-dense output block

    return pl.pallas_call(
        functools.partial(_flash_attn_kernel, scale=scale, heads_per_group=hg,
                          head_dim=hd, block_q=tq, block_kv=tkv),
        out_shape=jax.ShapeDtypeStruct((B, T, D), q.dtype),
        grid=grid,
        in_specs=[q_spec, kv_spec, kv_spec],
        out_specs=o_spec,
        scratch_shapes=[
            pltpu.VMEM((tq, hgd), q.dtype),            # scaled Q (scale hoisted out of kv loop)
            pltpu.VMEM((hg, tq, 1), jnp.float32),      # m (running max)
            pltpu.VMEM((hg, tq, 1), jnp.float32),      # l (running denom)
            pltpu.VMEM((tq, hgd), jnp.float32),        # acc (unnormalized output, lane-dense)
        ],
        compiler_params=_cparams(("parallel", "parallel", "parallel", "arbitrary")),
        cost_estimate=cost,
    )(q, k, v)


# ----------------------- FusedAttention module -----------------------

class FusedAttentionPallas:
    def __init__(self, *, d_model, n_heads, bias=True, clip_qkv=None,
                 dtype=jnp.float32, key=None):
        assert bias, "bias=True path implemented (matches module default)"
        assert d_model % n_heads == 0
        self.d_model = d_model
        self.n_heads = n_heads
        self.head_dim = d_model // n_heads
        self.clip_qkv = clip_qkv

        key = jax.random.PRNGKey(0) if key is None else key
        k1, k2, k3, k4 = jax.random.split(key, 4)
        bound = 1.0 / math.sqrt(d_model)  # PyTorch nn.Linear default init range

        def init(k, shape):
            return jax.random.uniform(k, shape, jnp.float32, -bound, bound).astype(dtype)

        # stored as (in, out) = transpose of nn.Linear.weight
        self.w_qkv = init(k1, (d_model, 3 * d_model))
        self.b_qkv = init(k2, (1, 3 * d_model))
        self.w_out = init(k3, (d_model, d_model))
        self.b_out = init(k4, (1, d_model))

        # Column-split views of the fused QKV projection (q | k | v along the output dim).
        D = d_model
        self.w_q, self.w_k, self.w_v = (self.w_qkv[:, 0:D], self.w_qkv[:, D:2 * D],
                                        self.w_qkv[:, 2 * D:3 * D])
        self.b_q, self.b_k, self.b_v = (self.b_qkv[:, 0:D], self.b_qkv[:, D:2 * D],
                                        self.b_qkv[:, 2 * D:3 * D])

    def __call__(self, x):
        B, T, D = x.shape
        x2d = x.reshape(B * T, D)
        # Fused QKV projection (+ optional clip) — single Pallas kernel, three head-packed outputs.
        q2d, k2d, v2d = pallas_qkv_proj(x2d, self.w_q, self.w_k, self.w_v,
                                        self.b_q, self.b_k, self.b_v, clip=self.clip_qkv)
        q = q2d.reshape(B, T, D)
        k = k2d.reshape(B, T, D)
        v = v2d.reshape(B, T, D)
        # Causal flash attention — writes a lane-dense (B, T, D) result directly.
        att = causal_attention(q, k, v, n_heads=self.n_heads)
        # Output projection.
        out = pallas_linear(att.reshape(B * T, D), self.w_out, self.b_out)
        return out.reshape(B, T, D)


# ----------------------- Pure-JAX reference for verification -----------------------

def reference_forward(mod, x):
    B, T, D = x.shape
    H, hd = mod.n_heads, mod.head_dim
    with jax.default_matmul_precision("highest"):
        qkv = x.reshape(B * T, D) @ mod.w_qkv + mod.b_qkv
        if mod.clip_qkv is not None:
            qkv = jnp.clip(qkv, -mod.clip_qkv, mod.clip_qkv)
        qkv = qkv.reshape(B, T, 3, H, hd)
        q, k, v = qkv[:, :, 0], qkv[:, :, 1], qkv[:, :, 2]
        q = q.transpose(0, 2, 1, 3).astype(jnp.float32)
        k = k.transpose(0, 2, 1, 3).astype(jnp.float32)
        v = v.transpose(0, 2, 1, 3).astype(jnp.float32)
        s = jnp.einsum("bhqd,bhkd->bhqk", q, k) / math.sqrt(hd)
        mask = jnp.tril(jnp.ones((T, T), bool))
        s = jnp.where(mask, s, -jnp.inf)
        p = jax.nn.softmax(s, axis=-1)
        att = jnp.einsum("bhqk,bhkd->bhqd", p, v)
        att = att.transpose(0, 2, 1, 3).reshape(B, T, D).astype(x.dtype)
        return (att.reshape(B * T, D) @ mod.w_out + mod.b_out).reshape(B, T, D)


if __name__ == "__main__":
    root = jax.random.PRNGKey(0)
    kx, kp, kx2, kp2 = jax.random.split(root, 4)

    # --- small-shape checks (B=2, T=8, d_model=32, n_heads=4) ---
    B, T, d_model, n_heads = 2, 8, 32, 4
    x = jax.random.normal(kx, (B, T, d_model), jnp.float32)

    # f32 path
    mod = FusedAttentionPallas(d_model=d_model, n_heads=n_heads, bias=True,
                               clip_qkv=None, key=kp)
    out = jax.block_until_ready(mod(x))
    assert out.shape == (B, T, d_model) and out.dtype == jnp.float32
    ref = reference_forward(mod, x)
    assert jnp.allclose(out, ref, atol=5e-3, rtol=5e-3), "f32 mismatch vs reference"

    # clip_qkv path
    mod_clip = FusedAttentionPallas(d_model=d_model, n_heads=n_heads, bias=True,
                                    clip_qkv=0.2, key=kp)
    out_clip = jax.block_until_ready(mod_clip(x))
    ref_clip = reference_forward(mod_clip, x)
    assert jnp.allclose(out_clip, ref_clip, atol=5e-3, rtol=5e-3), "clip_qkv mismatch"

    # bf16 MXU-feed path (f32 accumulation + f32 softmax inside the kernels)
    mod_bf16 = FusedAttentionPallas(d_model=d_model, n_heads=n_heads, bias=True,
                                    clip_qkv=None, dtype=jnp.bfloat16, key=kp)
    x_bf16 = x.astype(jnp.bfloat16)
    out_bf16 = jax.block_until_ready(mod_bf16(x_bf16))
    assert out_bf16.shape == (B, T, d_model) and out_bf16.dtype == jnp.bfloat16
    ref_bf16 = reference_forward(mod_bf16, x_bf16)
    assert jnp.allclose(out_bf16.astype(jnp.float32), ref_bf16.astype(jnp.float32),
                        atol=1e-1, rtol=1e-1), "bf16 mismatch vs reference"

    # --- multi-block check: exercises kv accumulation, interior/diagonal split and the
    #     clamped (DMA-skipping) KV index_map (B=1, T=1024, d_model=128, n_heads=1). ---
    B2, T2, dm2, nh2 = 1, 1024, 128, 1
    x2 = jax.random.normal(kx2, (B2, T2, dm2), jnp.float32)
    mod2 = FusedAttentionPallas(d_model=dm2, n_heads=nh2, bias=True, clip_qkv=None, key=kp2)
    out2 = jax.block_until_ready(mod2(x2))
    ref2 = reference_forward(mod2, x2)
    assert jnp.allclose(out2, ref2, atol=2e-2, rtol=2e-2), "multi-block mismatch vs reference"

    print("KERNEL_OK")
</pallas_src>

<mosaic_0001>
module attributes {stable_mosaic.version = 11 : i64} {
  func.func @_qkv_kernel(%arg0: i32, %arg1: i32, %arg2: i32, %arg3: memref<16x32xf32, #tpu.memory_space<vmem>>, %arg4: memref<32x32xf32, #tpu.memory_space<vmem>>, %arg5: memref<32x32xf32, #tpu.memory_space<vmem>>, %arg6: memref<32x32xf32, #tpu.memory_space<vmem>>, %arg7: memref<1x32xf32, #tpu.memory_space<vmem>>, %arg8: memref<1x32xf32, #tpu.memory_space<vmem>>, %arg9: memref<1x32xf32, #tpu.memory_space<vmem>>, %arg10: memref<16x32xf32, #tpu.memory_space<vmem>>, %arg11: memref<16x32xf32, #tpu.memory_space<vmem>>, %arg12: memref<16x32xf32, #tpu.memory_space<vmem>>, %arg13: memref<16x32xf32, #tpu.memory_space<vmem>>, %arg14: memref<16x32xf32, #tpu.memory_space<vmem>>, %arg15: memref<16x32xf32, #tpu.memory_space<vmem>>) attributes {dimension_semantics = [#tpu.dimension_semantics<parallel>, #tpu.dimension_semantics<parallel>, #tpu.dimension_semantics<arbitrary>], iteration_bounds = array<i64: 1, 1, 1>, scalar_prefetch = 0 : i64, scratch_operands = 3 : i64, tpu.core_type = #tpu.core_type<tc>, window_params = [{transform_indices = @transform_0, window_bounds = array<i64: 16, 32>}, {transform_indices = @transform_1, window_bounds = array<i64: 32, 32>}, {transform_indices = @transform_2, window_bounds = array<i64: 32, 32>}, {transform_indices = @transform_3, window_bounds = array<i64: 32, 32>}, {transform_indices = @transform_4, window_bounds = array<i64: 1, 32>}, {transform_indices = @transform_5, window_bounds = array<i64: 1, 32>}, {transform_indices = @transform_6, window_bounds = array<i64: 1, 32>}, {transform_indices = @transform_7, window_bounds = array<i64: 16, 32>}, {transform_indices = @transform_8, window_bounds = array<i64: 16, 32>}, {transform_indices = @transform_9, window_bounds = array<i64: 16, 32>}]} {
    %c0_i32 = arith.constant 0 : i32
    %0 = arith.cmpi eq, %arg2, %c0_i32 : i32
    %1 = arith.extui %0 : i1 to i32
    %c0_i32_0 = arith.constant 0 : i32
    %2 = arith.cmpi ne, %1, %c0_i32_0 : i32
    scf.if %2 {
      %cst_24 = arith.constant 0.000000e+00 : f32
      %22 = vector.broadcast %cst_24 : f32 to vector<16x32xf32>
      %c0_25 = arith.constant 0 : index
      %c0_26 = arith.constant 0 : index
      %23 = vector.load %arg13[%c0_25, %c0_26] : memref<16x32xf32, #tpu.memory_space<vmem>>, vector<16x32xf32>
      tpu.vector_store %arg13[%c0_25, %c0_26], %22 {strides = array<i32>} : memref<16x32xf32, #tpu.memory_space<vmem>>, vector<16x32xf32>,
      %cst_27 = arith.constant 0.000000e+00 : f32
      %24 = vector.broadcast %cst_27 : f32 to vector<16x32xf32>
      %c0_28 = arith.constant 0 : index
      %c0_29 = arith.constant 0 : index
      %25 = vector.load %arg14[%c0_28, %c0_29] : memref<16x32xf32, #tpu.memory_space<vmem>>, vector<16x32xf32>
      tpu.vector_store %arg14[%c0_28, %c0_29], %24 {strides = array<i32>} : memref<16x32xf32, #tpu.memory_space<vmem>>, vector<16x32xf32>,
      %cst_30 = arith.constant 0.000000e+00 : f32
      %26 = vector.broadcast %cst_30 : f32 to vector<16x32xf32>
      %c0_31 = arith.constant 0 : index
      %c0_32 = arith.constant 0 : index
      %27 = vector.load %arg15[%c0_31, %c0_32] : memref<16x32xf32, #tpu.memory_space<vmem>>, vector<16x32xf32>
      tpu.vector_store %arg15[%c0_31, %c0_32], %26 {strides = array<i32>} : memref<16x32xf32, #tpu.memory_space<vmem>>, vector<16x32xf32>,
    } else {
    }
    %c0 = arith.constant 0 : index
    %c0_1 = arith.constant 0 : index
    %3 = vector.load %arg3[%c0, %c0_1] : memref<16x32xf32, #tpu.memory_space<vmem>>, vector<16x32xf32>
    %c0_2 = arith.constant 0 : index
    %c0_3 = arith.constant 0 : index
    %4 = vector.load %arg13[%c0_2, %c0_3] : memref<16x32xf32, #tpu.memory_space<vmem>>, vector<16x32xf32>
    %c0_4 = arith.constant 0 : index
    %c0_5 = arith.constant 0 : index
    %5 = vector.load %arg4[%c0_4, %c0_5] : memref<32x32xf32, #tpu.memory_space<vmem>>, vector<32x32xf32>
    %cst = arith.constant dense<0.000000e+00> : vector<16x32xf32>
    %6 = tpu.matmul %3, %5, %cst {dimension_numbers = #tpu.dot_dimension_numbers<[1], [0], [0], [1], [0, 0, 1, 1], [], []>} : vector<16x32xf32>, vector<32x32xf32>, vector<16x32xf32> -> vector<16x32xf32>
    %7 = arith.addf %4, %6 : vector<16x32xf32>
    %c0_6 = arith.constant 0 : index
    %c0_7 = arith.constant 0 : index
    %8 = vector.load %arg13[%c0_6, %c0_7] : memref<16x32xf32, #tpu.memory_space<vmem>>, vector<16x32xf32>
    tpu.vector_store %arg13[%c0_6, %c0_7], %7 {strides = array<i32>} : memref<16x32xf32, #tpu.memory_space<vmem>>, vector<16x32xf32>,
    %c0_8 = arith.constant 0 : index
    %c0_9 = arith.constant 0 : index
    %9 = vector.load %arg14[%c0_8, %c0_9] : memref<16x32xf32, #tpu.memory_space<vmem>>, vector<16x32xf32>
    %c0_10 = arith.constant 0 : index
    %c0_11 = arith.constant 0 : index
    %10 = vector.load %arg5[%c0_10, %c0_11] : memref<32x32xf32, #tpu.memory_space<vmem>>, vector<32x32xf32>
    %cst_12 = arith.constant dense<0.000000e+00> : vector<16x32xf32>
    %11 = tpu.matmul %3, %10, %cst_12 {dimension_numbers = #tpu.dot_dimension_numbers<[1], [0], [0], [1], [0, 0, 1, 1], [], []>} : vector<16x32xf32>, vector<32x32xf32>, vector<16x32xf32> -> vector<16x32xf32>
    %12 = arith.addf %9, %11 : vector<16x32xf32>
    %c0_13 = arith.constant 0 : index
    %c0_14 = arith.constant 0 : index
    %13 = vector.load %arg14[%c0_13, %c0_14] : memref<16x32xf32, #tpu.memory_space<vmem>>, vector<16x32xf32>
    tpu.vector_store %arg14[%c0_13, %c0_14], %12 {strides = array<i32>} : memref<16x32xf32, #tpu.memory_space<vmem>>, vector<16x32xf32>,
    %c0_15 = arith.constant 0 : index
    %c0_16 = arith.constant 0 : index
    %14 = vector.load %arg15[%c0_15, %c0_16] : memref<16x32xf32, #tpu.memory_space<vmem>>, vector<16x32xf32>
    %c0_17 = arith.constant 0 : index
    %c0_18 = arith.constant 0 : index
    %15 = vector.load %arg6[%c0_17, %c0_18] : memref<32x32xf32, #tpu.memory_space<vmem>>, vector<32x32xf32>
    %cst_19 = arith.constant dense<0.000000e+00> : vector<16x32xf32>
    %16 = tpu.matmul %3, %15, %cst_19 {dimension_numbers = #tpu.dot_dimension_numbers<[1], [0], [0], [1], [0, 0, 1, 1], [], []>} : vector<16x32xf32>, vector<32x32xf32>, vector<16x32xf32> -> vector<16x32xf32>
    %17 = arith.addf %14, %16 : vector<16x32xf32>
    %c0_20 = arith.constant 0 : index
    %c0_21 = arith.constant 0 : index
    %18 = vector.load %arg15[%c0_20, %c0_21] : memref<16x32xf32, #tpu.memory_space<vmem>>, vector<16x32xf32>
    tpu.vector_store %arg15[%c0_20, %c0_21], %17 {strides = array<i32>} : memref<16x32xf32, #tpu.memory_space<vmem>>, vector<16x32xf32>,
    %c0_i32_22 = arith.constant 0 : i32
    %19 = arith.cmpi eq, %arg2, %c0_i32_22 : i32
    %20 = arith.extui %19 : i1 to i32
    %c0_i32_23 = arith.constant 0 : i32
    %21 = arith.cmpi ne, %20, %c0_i32_23 : i32
    scf.if %21 {
      %c0_24 = arith.constant 0 : index
      %c0_25 = arith.constant 0 : index
      %22 = vector.load %arg13[%c0_24, %c0_25] : memref<16x32xf32, #tpu.memory_space<vmem>>, vector<16x32xf32>
      %c0_26 = arith.constant 0 : index
      %c0_27 = arith.constant 0 : index
      %23 = vector.load %arg7[%c0_26, %c0_27] : memref<1x32xf32, #tpu.memory_space<vmem>>, vector<1x32xf32>
      %24 = vector.broadcast %23 : vector<1x32xf32> to vector<16x32xf32>
      %25 = arith.addf %22, %24 : vector<16x32xf32>
      %c0_28 = arith.constant 0 : index
      %c0_29 = arith.constant 0 : index
      %26 = vector.load %arg10[%c0_28, %c0_29] : memref<16x32xf32, #tpu.memory_space<vmem>>, vector<16x32xf32>
      tpu.vector_store %arg10[%c0_28, %c0_29], %25 {strides = array<i32>} : memref<16x32xf32, #tpu.memory_space<vmem>>, vector<16x32xf32>,
      %c0_30 = arith.constant 0 : index
      %c0_31 = arith.constant 0 : index
      %27 = vector.load %arg14[%c0_30, %c0_31] : memref<16x32xf32, #tpu.memory_space<vmem>>, vector<16x32xf32>
      %c0_32 = arith.constant 0 : index
      %c0_33 = arith.constant 0 : index
      %28 = vector.load %arg8[%c0_32, %c0_33] : memref<1x32xf32, #tpu.memory_space<vmem>>, vector<1x32xf32>
      %29 = vector.broadcast %28 : vector<1x32xf32> to vector<16x32xf32>
      %30 = arith.addf %27, %29 : vector<16x32xf32>
      %c0_34 = arith.constant 0 : index
      %c0_35 = arith.constant 0 : index
      %31 = vector.load %arg11[%c0_34, %c0_35] : memref<16x32xf32, #tpu.memory_space<vmem>>, vector<16x32xf32>
      tpu.vector_store %arg11[%c0_34, %c0_35], %30 {strides = array<i32>} : memref<16x32xf32, #tpu.memory_space<vmem>>, vector<16x32xf32>,
      %c0_36 = arith.constant 0 : index
      %c0_37 = arith.constant 0 : index
      %32 = vector.load %arg15[%c0_36, %c0_37] : memref<16x32xf32, #tpu.memory_space<vmem>>, vector<16x32xf32>
      %c0_38 = arith.constant 0 : index
      %c0_39 = arith.constant 0 : index
      %33 = vector.load %arg9[%c0_38, %c0_39] : memref<1x32xf32, #tpu.memory_space<vmem>>, vector<1x32xf32>
      %34 = vector.broadcast %33 : vector<1x32xf32> to vector<16x32xf32>
      %35 = arith.addf %32, %34 : vector<16x32xf32>
      %c0_40 = arith.constant 0 : index
      %c0_41 = arith.constant 0 : index
      %36 = vector.load %arg12[%c0_40, %c0_41] : memref<16x32xf32, #tpu.memory_space<vmem>>, vector<16x32xf32>
      tpu.vector_store %arg12[%c0_40, %c0_41], %35 {strides = array<i32>} : memref<16x32xf32, #tpu.memory_space<vmem>>, vector<16x32xf32>,
    } else {
    }
    return
  }
  func.func @transform_0(%arg0: i32, %arg1: i32, %arg2: i32) -> (i32, i32) {
    %c0_i32 = arith.constant 0 : i32
    return %arg0, %arg2 : i32, i32
  }
  func.func @transform_1(%arg0: i32, %arg1: i32, %arg2: i32) -> (i32, i32) {
    %c0_i32 = arith.constant 0 : i32
    return %arg2, %arg1 : i32, i32
  }
  func.func @transform_2(%arg0: i32, %arg1: i32, %arg2: i32) -> (i32, i32) {
    %c0_i32 = arith.constant 0 : i32
    return %arg2, %arg1 : i32, i32
  }
  func.func @transform_3(%arg0: i32, %arg1: i32, %arg2: i32) -> (i32, i32) {
    %c0_i32 = arith.constant 0 : i32
    return %arg2, %arg1 : i32, i32
  }
  func.func @transform_4(%arg0: i32, %arg1: i32, %arg2: i32) -> (i32, i32) {
    %c0_i32 = arith.constant 0 : i32
    %c0_i32_0 = arith.constant 0 : i32
    return %c0_i32, %arg1 : i32, i32
  }
  func.func @transform_5(%arg0: i32, %arg1: i32, %arg2: i32) -> (i32, i32) {
    %c0_i32 = arith.constant 0 : i32
    %c0_i32_0 = arith.constant 0 : i32
    return %c0_i32, %arg1 : i32, i32
  }
  func.func @transform_6(%arg0: i32, %arg1: i32, %arg2: i32) -> (i32, i32) {
    %c0_i32 = arith.constant 0 : i32
    %c0_i32_0 = arith.constant 0 : i32
    return %c0_i32, %arg1 : i32, i32
  }
  func.func @transform_7(%arg0: i32, %arg1: i32, %arg2: i32) -> (i32, i32) {
    %c0_i32 = arith.constant 0 : i32
    return %arg0, %arg1 : i32, i32
  }
  func.func @transform_8(%arg0: i32, %arg1: i32, %arg2: i32) -> (i32, i32) {
    %c0_i32 = arith.constant 0 : i32
    return %arg0, %arg1 : i32, i32
  }
  func.func @transform_9(%arg0: i32, %arg1: i32, %arg2: i32) -> (i32, i32) {
    %c0_i32 = arith.constant 0 : i32
    return %arg0, %arg1 : i32, i32
  }
}

</mosaic_0001>

<llo_original>
// kernel: tpu_custom_call.1
$region0: #{tpu_custom_call.1}
  #allocation0 [shape = 'u32[]', space=smem, size = 0x4, offset = 0x4, fixed_abs, tag = 'smem constant byte address 0x4 - core index']
  #allocation1 [shape = 'u32[144,128]{1,0:T(1,128)}', space=vmem, size = 0x12000, scoped, tag = 'internal scratch']
  #allocation2 [shape = 'f32[16,32]{1,0:T(8,128)}', space=vmem, size = 0x2000, scoped, tag = 'scratch operand']
  #allocation3 [shape = 'f32[16,32]{1,0:T(8,128)}', space=vmem, size = 0x2000, scoped, tag = 'scratch operand']
  #allocation4 [shape = 'f32[16,32]{1,0:T(8,128)}', space=vmem, size = 0x2000, scoped, tag = 'scratch operand']
  %s0 = inlined_call_operand.hbm [shape: f32[16,32], index: 0, kind: input, shape index: {}]
  %s1 = inlined_call_operand.hbm [shape: f32[32,32], index: 1, kind: input, shape index: {}]
  %s2 = inlined_call_operand.hbm [shape: f32[32,32], index: 2, kind: input, shape index: {}]
  %s3 = inlined_call_operand.hbm [shape: f32[32,32], index: 3, kind: input, shape index: {}]
  %s4 = inlined_call_operand.vmem [shape: f32[1,32], index: 4, kind: input, shape index: {}]
  %s5 = inlined_call_operand.vmem [shape: f32[1,32], index: 5, kind: input, shape index: {}]
  %s6 = inlined_call_operand.vmem [shape: f32[1,32], index: 6, kind: input, shape index: {}]
  %s7 = inlined_call_operand.hbm [shape: f32[16,32], index: 7, kind: output, shape index: {0}]
  %s8 = inlined_call_operand.hbm [shape: f32[16,32], index: 8, kind: output, shape index: {1}]
  %s9 = inlined_call_operand.hbm [shape: f32[16,32], index: 9, kind: output, shape index: {2}]
  %10 = xla_tuple %s7, %s8, %s9
  %s11 = sld [smem:[#allocation0]]
  $region78: #{tpu_custom_call.1} parent=0
    _
  %s13 = ssub.s32 1, %s11
  %s14 = scalar_select 0, %s13, %s11
  $region1: #{tpu_custom_call.1} parent=0
    #allocation5 [shape = 'u8[8192]{0}', space=vmem, size = 0x2000, scoped, tag = 'input window, operand 0, single buffered']
    #allocation6 [shape = 's32[1]{0}', space=sflag, size = 0x4, scoped, tag = 'scoped memory for tpu_custom_call.1']
    #allocation7 [shape = 's32[1]{0}', space=sflag, size = 0x4, scoped, tag = 'scoped memory for tpu_custom_call.1']
    #allocation8 [shape = 'u8[16384]{0}', space=vmem, size = 0x4000, scoped, tag = 'input window, operand 1, single buffered']
    #allocation9 [shape = 's32[1]{0}', space=sflag, size = 0x4, scoped, tag = 'scoped memory for tpu_custom_call.1']
    #allocation10 [shape = 'u8[16384]{0}', space=vmem, size = 0x4000, scoped, tag = 'input window, operand 2, single buffered']
    #allocation11 [shape = 'u8[16384]{0}', space=vmem, size = 0x4000, scoped, tag = 'input window, operand 3, single buffered']
    #allocation12 [shape = 's32[1]{0}', space=sflag, size = 0x4, scoped, tag = 'scoped memory for tpu_custom_call.1']
    #allocation13 [shape = 'u8[8192]{0}', space=vmem, size = 0x2000, scoped, tag = 'output window, operand 0, single buffered']
    #allocation14 [shape = 'u8[8192]{0}', space=vmem, size = 0x2000, scoped, tag = 'output window, operand 1, single buffered']
    #allocation15 [shape = 's32[1]{0}', space=sflag, size = 0x4, scoped, tag = 'scoped memory for tpu_custom_call.1']
    #allocation16 [shape = 'u8[8192]{0}', space=vmem, size = 0x2000, scoped, tag = 'output window, operand 2, single buffered']
    %15 = vsyncpa [#allocation6], 0
    %16 = vsyncpa [#allocation9], 0
    %17 = vsyncpa [#allocation12], 0
    %18 = vsyncpa [#allocation7], 0
    %19 = vsyncpa [#allocation15], 0
    // Predicated region
    $region2: #{tpu_custom_call.1} parent=1 // pred_check
      _
    $region3: #{tpu_custom_call.1} parent=1 // pred_check_branch
      %21 = sbr.rel (0) target = $region5
    $region4: #{tpu_custom_call.1} parent=1 // pred_region
      %s23 = ssub.s32 256, 256
      %24 = vsyncadd [#allocation6], %s23
      %s25 = sshll.u32 [#allocation5], 4
      %s26 = int_to_ptr.vmem [resolvable:$true] %s25
      %31 = dma.hbm_to_vmem [thread:$0]  %s0, 256, %s26, [#allocation6], 128, 128, 8
    $region5: #{tpu_custom_call.1} parent=1 // pred_fallthru
      _
    // Predicated region
    $region6: #{tpu_custom_call.1} parent=1 // pred_check
      _
    $region7: #{tpu_custom_call.1} parent=1 // pred_check_branch
      %33 = sbr.rel (0) target = $region9
    $region8: #{tpu_custom_call.1} parent=1 // pred_region
      %s35 = ssub.s32 512, 512
      %36 = vsyncadd [#allocation9], %s35
      %s37 = sshll.u32 [#allocation8], 4
      %s38 = int_to_ptr.vmem [resolvable:$true] %s37
      %43 = dma.hbm_to_vmem [thread:$0]  %s1, 512, %s38, [#allocation9], 128, 128, 8
    $region9: #{tpu_custom_call.1} parent=1 // pred_fallthru
      _
    // Predicated region
    $region10: #{tpu_custom_call.1} parent=1 // pred_check
      _
    $region11: #{tpu_custom_call.1} parent=1 // pred_check_branch
      %45 = sbr.rel (0) target = $region13
    $region12: #{tpu_custom_call.1} parent=1 // pred_region
      %s47 = ssub.s32 512, 512
      %48 = vsyncadd [#allocation9], %s47
      %s49 = sshll.u32 [#allocation10], 4
      %s50 = int_to_ptr.vmem [resolvable:$true] %s49
      %55 = dma.hbm_to_vmem [thread:$0]  %s2, 512, %s50, [#allocation9], 128, 128, 8
    $region13: #{tpu_custom_call.1} parent=1 // pred_fallthru
      _
    // Predicated region
    $region14: #{tpu_custom_call.1} parent=1 // pred_check
      _
    $region15: #{tpu_custom_call.1} parent=1 // pred_check_branch
      %57 = sbr.rel (0) target = $region17
    $region16: #{tpu_custom_call.1} parent=1 // pred_region
      %s59 = ssub.s32 512, 512
      %60 = vsyncadd [#allocation12], %s59
      %s61 = sshll.u32 [#allocation11], 4
      %s62 = int_to_ptr.vmem [resolvable:$true] %s61
      %67 = dma.hbm_to_vmem [thread:$0]  %s3, 512, %s62, [#allocation12], 128, 128, 8
    $region17: #{tpu_custom_call.1} parent=1 // pred_fallthru
      _
    // Predicated region
    $region18: #{tpu_custom_call.1} parent=1 // pred_check
      _
    $region19: #{tpu_custom_call.1} parent=1 // pred_check_branch
      %69 = sbr.rel (0) target = $region21
    $region20: #{tpu_custom_call.1} parent=1 // pred_region
      _
    $region21: #{tpu_custom_call.1} parent=1 // pred_fallthru
      _
    // Predicated region
    $region22: #{tpu_custom_call.1} parent=1 // pred_check
      _
    $region23: #{tpu_custom_call.1} parent=1 // pred_check_branch
      %71 = sbr.rel (0) target = $region25
    $region24: #{tpu_custom_call.1} parent=1 // pred_region
      _
    $region25: #{tpu_custom_call.1} parent=1 // pred_fallthru
      _
    // Predicated region
    $region26: #{tpu_custom_call.1} parent=1 // pred_check
      _
    $region27: #{tpu_custom_call.1} parent=1 // pred_check_branch
      %73 = sbr.rel (0) target = $region29
    $region28: #{tpu_custom_call.1} parent=1 // pred_region
      _
    $region29: #{tpu_custom_call.1} parent=1 // pred_fallthru
      _
    // Predicated region
    $region30: #{tpu_custom_call.1} parent=1 // pred_check
      _
    $region31: #{tpu_custom_call.1} parent=1 // pred_check_branch
      %75 = sbr.rel (0) target = $region33
    $region32: #{tpu_custom_call.1} parent=1 // pred_region
      %76 = dma.done [#allocation6], 256
    $region33: #{tpu_custom_call.1} parent=1 // pred_fallthru
      _
    // Predicated region
    $region34: #{tpu_custom_call.1} parent=1 // pred_check
      _
    $region35: #{tpu_custom_call.1} parent=1 // pred_check_branch
      %78 = sbr.rel (0) target = $region37
    $region36: #{tpu_custom_call.1} parent=1 // pred_region
      %79 = dma.done [#allocation9], 512
    $region37: #{tpu_custom_call.1} parent=1 // pred_fallthru
      _
    // Predicated region
    $region38: #{tpu_custom_call.1} parent=1 // pred_check
      _
    $region39: #{tpu_custom_call.1} parent=1 // pred_check_branch
      %81 = sbr.rel (0) target = $region41
    $region40: #{tpu_custom_call.1} parent=1 // pred_region
      %82 = dma.done [#allocation9], 512
    $region41: #{tpu_custom_call.1} parent=1 // pred_fallthru
      _
    // Predicated region
    $region42: #{tpu_custom_call.1} parent=1 // pred_check
      _
    $region43: #{tpu_custom_call.1} parent=1 // pred_check_branch
      %84 = sbr.rel (0) target = $region45
    $region44: #{tpu_custom_call.1} parent=1 // pred_region
      %85 = dma.done [#allocation12], 512
    $region45: #{tpu_custom_call.1} parent=1 // pred_fallthru
      _
    %p86 = scmp.eq.s32.totalorder 0, 0
    // Predicated region
    $region46: #{tpu_custom_call.1} parent=1 // pred_check
      %p87 = pneg %p86
    $region47: #{tpu_custom_call.1} parent=1 // pred_check_branch
      %89 = sbr.rel (%p87) target = $region49
    $region48: #{tpu_custom_call.1} parent=1 // pred_region
      %vm90 = vcmask 261120
      %91 = vst.msk [vmem:[#allocation2] sm:$0xff] %vm90, 0.0
      %92 = vst.msk [vmem:[#allocation2 + $0x8] sm:$0xff] %vm90, 0.0
      %93 = vst.msk [vmem:[#allocation3] sm:$0xff] %vm90, 0.0
      %94 = vst.msk [vmem:[#allocation3 + $0x8] sm:$0xff] %vm90, 0.0
      %95 = vst.msk [vmem:[#allocation4] sm:$0xff] %vm90, 0.0
      %96 = vst.msk [vmem:[#allocation4 + $0x8] sm:$0xff] %vm90, 0.0
    $region49: #{tpu_custom_call.1} parent=1 // pred_fallthru
      _
    %v97 = vld [vmem:[#allocation5] sm:$0xff]
    %v98 = vld [vmem:[#allocation5 + $0x8] sm:$0xff]
    %v99 = vld [vmem:[#allocation2] sm:$0xff]
    %v100 = vld [vmem:[#allocation2 + $0x8] sm:$0xff]
    %v101 = vld [vmem:[#allocation8] sm:$0xff]
    %v102 = vld [vmem:[#allocation8 + $0x8] sm:$0xff]
    %v103 = vld [vmem:[#allocation8 + $0x10] sm:$0xff]
    %v104 = vld [vmem:[#allocation8 + $0x18] sm:$0xff]
    %vm105 = vcmask 261120
    %v107 = vsel %vm105, %v97, 0
    %v110 = vsel %vm105, %v98, 0
    %112 = vmatprep.subr.mxu0 0.0
    %113 = vmatpush1.msra.mxu0 %v101
    %114 = vmatprep.subr.mxu0 0.0
    %115 = vmatpush1.msra.mxu0 %v102
    %116 = vmatprep.subr.mxu0 0.0
    %117 = vmatpush1.msra.mxu0 %v103
    %118 = vmatprep.subr.mxu0 0.0
    %119 = vmatpush1.msra.mxu0 %v104
    %120 = vmatprep.subr.mxu0 0.0
    %121 = vmatpush1.msra.mxu0 0.0
    %122 = vmatprep.subr.mxu0 0.0
    %123 = vmatpush1.msra.mxu0 0.0
    %124 = vmatprep.subr.mxu0 0.0
    %125 = vmatpush1.msra.mxu0 0.0
    %126 = vmatprep.subr.mxu0 0.0
    %127 = vmatpush1.msra.mxu0 0.0
    %128 = vmatprep.subr.mxu0 0.0
    %129 = vmatpush1.msra.mxu0 0.0
    %130 = vmatprep.subr.mxu0 0.0
    %131 = vmatpush1.msra.mxu0 0.0
    %132 = vmatprep.subr.mxu0 0.0
    %133 = vmatpush1.msra.mxu0 0.0
    %134 = vmatprep.subr.mxu0 0.0
    %135 = vmatpush1.msra.mxu0 0.0
    %136 = vmatprep.subr.mxu0 0.0
    %137 = vmatpush1.msra.mxu0 0.0
    %138 = vmatprep.subr.mxu0 0.0
    %139 = vmatpush1.msra.mxu0 0.0
    %140 = vmatprep.subr.mxu0 0.0
    %141 = vmatpush1.msra.mxu0 0.0
    %142 = vmatprep.subr.mxu0 0.0
    %143 = vmatpush1.msra.mxu0 0.0
    %144 = vmatprep.subr.mxu0 0.0
    %145 = vmatpush1.msra.mxu0 0.0
    %146 = vmatprep.subr.mxu0 0.0
    %147 = vmatpush1.msra.mxu0 0.0
    %148 = vmatprep.subr.mxu0 0.0
    %149 = vmatpush1.msra.mxu0 0.0
    %150 = vmatprep.subr.mxu0 0.0
    %151 = vmatpush1.msra.mxu0 0.0
    %152 = vmatprep.subr.mxu0 0.0
    %153 = vmatpush1.msra.mxu0 0.0
    %154 = vmatprep.subr.mxu0 0.0
    %155 = vmatpush1.msra.mxu0 0.0
    %156 = vmatprep.subr.mxu0 0.0
    %157 = vmatpush1.msra.mxu0 0.0
    %158 = vmatprep.subr.mxu0 0.0
    %159 = vmatpush1.msra.mxu0 0.0
    %160 = vmatprep.subr.mxu0 0.0
    %161 = vmatpush1.msra.mxu0 0.0
    %162 = vmatprep.subr.mxu0 0.0
    %163 = vmatpush1.msra.mxu0 0.0
    %164 = vmatprep.subr.mxu0 0.0
    %165 = vmatpush1.msra.mxu0 0.0
    %166 = vmatprep.subr.mxu0 0.0
    %167 = vmatpush1.msra.mxu0 0.0
    %168 = vmatprep.subr.mxu0 0.0
    %169 = vmatpush1.msra.mxu0 0.0
    %170 = vmatprep.subr.mxu0 0.0
    %171 = vmatpush1.msra.mxu0 0.0
    %172 = vmatprep.subr.mxu0 0.0
    %173 = vmatpush1.msra.mxu0 0.0
    %174 = vmatprep.subr.mxu0 0.0
    %175 = vmatpush1.msra.mxu0 0.0
    %176 = vmatprep.mubr.f32.mxu0 0.0
    %177 = vmatmul.mubr.f32.gmra.mrb[0].mxu0 %v107
    %v178 = vpop.f32.mrb[0].mxu0
    %v179 = vadd.f32 0.0, %v178
    %v180 = vpop.f32.mrb[0].mxu0
    %181 = vmatprep.mubr.f32.mxu0 0.0
    %182 = vmatmul.mubr.f32.gmra.mrb[0].mxu0 %v110
    %v183 = vpop.f32.mrb[0].mxu0
    %v184 = vadd.f32 0.0, %v183
    %v185 = vpop.f32.mrb[0].mxu0
    %186 = vdwg.mxu0
    %v187 = vadd.f32 %v99, %v179
    %v188 = vadd.f32 %v100, %v184
    %189 = vst.msk [vmem:[#allocation2] sm:$0xff] %vm105, %v187
    %190 = vst.msk [vmem:[#allocation2 + $0x8] sm:$0xff] %vm105, %v188
    %v191 = vld [vmem:[#allocation3] sm:$0xff]
    %v192 = vld [vmem:[#allocation3 + $0x8] sm:$0xff]
    %v193 = vld [vmem:[#allocation10] sm:$0xff]
    %v194 = vld [vmem:[#allocation10 + $0x8] sm:$0xff]
    %v195 = vld [vmem:[#allocation10 + $0x10] sm:$0xff]
    %v196 = vld [vmem:[#allocation10 + $0x18] sm:$0xff]
    %197 = vmatprep.subr.mxu0 0.0
    %198 = vmatpush1.msra.mxu0 %v193
    %199 = vmatprep.subr.mxu0 0.0
    %200 = vmatpush1.msra.mxu0 %v194
    %201 = vmatprep.subr.mxu0 0.0
    %202 = vmatpush1.msra.mxu0 %v195
    %203 = vmatprep.subr.mxu0 0.0
    %204 = vmatpush1.msra.mxu0 %v196
    %205 = vmatprep.subr.mxu0 0.0
    %206 = vmatpush1.msra.mxu0 0.0
    %207 = vmatprep.subr.mxu0 0.0
    %208 = vmatpush1.msra.mxu0 0.0
    %209 = vmatprep.subr.mxu0 0.0
    %210 = vmatpush1.msra.mxu0 0.0
    %211 = vmatprep.subr.mxu0 0.0
    %212 = vmatpush1.msra.mxu0 0.0
    %213 = vmatprep.subr.mxu0 0.0
    %214 = vmatpush1.msra.mxu0 0.0
    %215 = vmatprep.subr.mxu0 0.0
    %216 = vmatpush1.msra.mxu0 0.0
    %217 = vmatprep.subr.mxu0 0.0
    %218 = vmatpush1.msra.mxu0 0.0
    %219 = vmatprep.subr.mxu0 0.0
    %220 = vmatpush1.msra.mxu0 0.0
    %221 = vmatprep.subr.mxu0 0.0
    %222 = vmatpush1.msra.mxu0 0.0
    %223 = vmatprep.subr.mxu0 0.0
    %224 = vmatpush1.msra.mxu0 0.0
    %225 = vmatprep.subr.mxu0 0.0
    %226 = vmatpush1.msra.mxu0 0.0
    %227 = vmatprep.subr.mxu0 0.0
    %228 = vmatpush1.msra.mxu0 0.0
    %229 = vmatprep.subr.mxu0 0.0
    %230 = vmatpush1.msra.mxu0 0.0
    %231 = vmatprep.subr.mxu0 0.0
    %232 = vmatpush1.msra.mxu0 0.0
    %233 = vmatprep.subr.mxu0 0.0
    %234 = vmatpush1.msra.mxu0 0.0
    %235 = vmatprep.subr.mxu0 0.0
    %236 = vmatpush1.msra.mxu0 0.0
    %237 = vmatprep.subr.mxu0 0.0
    %238 = vmatpush1.msra.mxu0 0.0
    %239 = vmatprep.subr.mxu0 0.0
    %240 = vmatpush1.msra.mxu0 0.0
    %241 = vmatprep.subr.mxu0 0.0
    %242 = vmatpush1.msra.mxu0 0.0
    %243 = vmatprep.subr.mxu0 0.0
    %244 = vmatpush1.msra.mxu0 0.0
    %245 = vmatprep.subr.mxu0 0.0
    %246 = vmatpush1.msra.mxu0 0.0
    %247 = vmatprep.subr.mxu0 0.0
    %248 = vmatpush1.msra.mxu0 0.0
    %249 = vmatprep.subr.mxu0 0.0
    %250 = vmatpush1.msra.mxu0 0.0
    %251 = vmatprep.subr.mxu0 0.0
    %252 = vmatpush1.msra.mxu0 0.0
    %253 = vmatprep.subr.mxu0 0.0
    %254 = vmatpush1.msra.mxu0 0.0
    %255 = vmatprep.subr.mxu0 0.0
    %256 = vmatpush1.msra.mxu0 0.0
    %257 = vmatprep.subr.mxu0 0.0
    %258 = vmatpush1.msra.mxu0 0.0
    %259 = vmatprep.subr.mxu0 0.0
    %260 = vmatpush1.msra.mxu0 0.0
    %261 = vmatprep.mubr.f32.mxu0 0.0
    %262 = vmatmul.mubr.f32.gmra.mrb[0].mxu0 %v107
    %v263 = vpop.f32.mrb[0].mxu0
    %v264 = vadd.f32 0.0, %v263
    %v265 = vpop.f32.mrb[0].mxu0
    %266 = vmatprep.mubr.f32.mxu0 0.0
    %267 = vmatmul.mubr.f32.gmra.mrb[0].mxu0 %v110
    %v268 = vpop.f32.mrb[0].mxu0
    %v269 = vadd.f32 0.0, %v268
    %v270 = vpop.f32.mrb[0].mxu0
    %271 = vdwg.mxu0
    %v272 = vadd.f32 %v191, %v264
    %v273 = vadd.f32 %v192, %v269
    %274 = vst.msk [vmem:[#allocation3] sm:$0xff] %vm105, %v272
    %275 = vst.msk [vmem:[#allocation3 + $0x8] sm:$0xff] %vm105, %v273
    %v276 = vld [vmem:[#allocation4] sm:$0xff]
    %v277 = vld [vmem:[#allocation4 + $0x8] sm:$0xff]
    %v278 = vld [vmem:[#allocation11] sm:$0xff]
    %v279 = vld [vmem:[#allocation11 + $0x8] sm:$0xff]
    %v280 = vld [vmem:[#allocation11 + $0x10] sm:$0xff]
    %v281 = vld [vmem:[#allocation11 + $0x18] sm:$0xff]
    %282 = vmatprep.subr.mxu0 0.0
    %283 = vmatpush1.msra.mxu0 %v278
    %284 = vmatprep.subr.mxu0 0.0
    %285 = vmatpush1.msra.mxu0 %v279
    %286 = vmatprep.subr.mxu0 0.0
    %287 = vmatpush1.msra.mxu0 %v280
    %288 = vmatprep.subr.mxu0 0.0
    %289 = vmatpush1.msra.mxu0 %v281
    %290 = vmatprep.subr.mxu0 0.0
    %291 = vmatpush1.msra.mxu0 0.0
    %292 = vmatprep.subr.mxu0 0.0
    %293 = vmatpush1.msra.mxu0 0.0
    %294 = vmatprep.subr.mxu0 0.0
    %295 = vmatpush1.msra.mxu0 0.0
    %296 = vmatprep.subr.mxu0 0.0
    %297 = vmatpush1.msra.mxu0 0.0
    %298 = vmatprep.subr.mxu0 0.0
    %299 = vmatpush1.msra.mxu0 0.0
    %300 = vmatprep.subr.mxu0 0.0
    %301 = vmatpush1.msra.mxu0 0.0
    %302 = vmatprep.subr.mxu0 0.0
    %303 = vmatpush1.msra.mxu0 0.0
    %304 = vmatprep.subr.mxu0 0.0
    %305 = vmatpush1.msra.mxu0 0.0
    %306 = vmatprep.subr.mxu0 0.0
    %307 = vmatpush1.msra.mxu0 0.0
    %308 = vmatprep.subr.mxu0 0.0
    %309 = vmatpush1.msra.mxu0 0.0
    %310 = vmatprep.subr.mxu0 0.0
    %311 = vmatpush1.msra.mxu0 0.0
    %312 = vmatprep.subr.mxu0 0.0
    %313 = vmatpush1.msra.mxu0 0.0
    %314 = vmatprep.subr.mxu0 0.0
    %315 = vmatpush1.msra.mxu0 0.0
    %316 = vmatprep.subr.mxu0 0.0
    %317 = vmatpush1.msra.mxu0 0.0
    %318 = vmatprep.subr.mxu0 0.0
    %319 = vmatpush1.msra.mxu0 0.0
    %320 = vmatprep.subr.mxu0 0.0
    %321 = vmatpush1.msra.mxu0 0.0
    %322 = vmatprep.subr.mxu0 0.0
    %323 = vmatpush1.msra.mxu0 0.0
    %324 = vmatprep.subr.mxu0 0.0
    %325 = vmatpush1.msra.mxu0 0.0
    %326 = vmatprep.subr.mxu0 0.0
    %327 = vmatpush1.msra.mxu0 0.0
    %328 = vmatprep.subr.mxu0 0.0
    %329 = vmatpush1.msra.mxu0 0.0
    %330 = vmatprep.subr.mxu0 0.0
    %331 = vmatpush1.msra.mxu0 0.0
    %332 = vmatprep.subr.mxu0 0.0
    %333 = vmatpush1.msra.mxu0 0.0
    %334 = vmatprep.subr.mxu0 0.0
    %335 = vmatpush1.msra.mxu0 0.0
    %336 = vmatprep.subr.mxu0 0.0
    %337 = vmatpush1.msra.mxu0 0.0
    %338 = vmatprep.subr.mxu0 0.0
    %339 = vmatpush1.msra.mxu0 0.0
    %340 = vmatprep.subr.mxu0 0.0
    %341 = vmatpush1.msra.mxu0 0.0
    %342 = vmatprep.subr.mxu0 0.0
    %343 = vmatpush1.msra.mxu0 0.0
    %344 = vmatprep.subr.mxu0 0.0
    %345 = vmatpush1.msra.mxu0 0.0
    %346 = vmatprep.mubr.f32.mxu0 0.0
    %347 = vmatmul.mubr.f32.gmra.mrb[0].mxu0 %v107
    %v348 = vpop.f32.mrb[0].mxu0
    %v349 = vadd.f32 0.0, %v348
    %v350 = vpop.f32.mrb[0].mxu0
    %351 = vmatprep.mubr.f32.mxu0 0.0
    %352 = vmatmul.mubr.f32.gmra.mrb[0].mxu0 %v110
    %v353 = vpop.f32.mrb[0].mxu0
    %v354 = vadd.f32 0.0, %v353
    %v355 = vpop.f32.mrb[0].mxu0
    %356 = vdwg.mxu0
    %v357 = vadd.f32 %v276, %v349
    %v358 = vadd.f32 %v277, %v354
    %359 = vst.msk [vmem:[#allocation4] sm:$0xff] %vm105, %v357
    %360 = vst.msk [vmem:[#allocation4 + $0x8] sm:$0xff] %vm105, %v358
    // Predicated region
    $region50: #{tpu_custom_call.1} parent=1 // pred_check
      %p361 = pneg %p86
    $region51: #{tpu_custom_call.1} parent=1 // pred_check_branch
      %363 = sbr.rel (%p361) target = $region53
    $region52: #{tpu_custom_call.1} parent=1 // pred_region
      %v364 = vld [vmem:[#allocation2] sm:$0xff]
      %v365 = vld [vmem:[#allocation2 + $0x8] sm:$0xff]
      %v366 = vld [vmem:[%s4] sm:$0x1]
      %v368 = vlaneseq
      %v369 = vshrl.u32 %v368, 7
      %v370 = vsub.s32 0, %v369
      %v371 = vrot.slane %v366, %v370
      %v373 = vadd.f32 %v364, %v371
      %v374 = vadd.f32 %v365, %v371
      %375 = vst.msk [vmem:[#allocation13] sm:$0xff] %vm105, %v373
      %376 = vst.msk [vmem:[#allocation13 + $0x8] sm:$0xff] %vm105, %v374
      %v377 = vld [vmem:[#allocation3] sm:$0xff]
      %v378 = vld [vmem:[#allocation3 + $0x8] sm:$0xff]
      %v379 = vld [vmem:[%s5] sm:$0x1]
      %v381 = vlaneseq
      %v382 = vshrl.u32 %v381, 7
      %v383 = vsub.s32 0, %v382
      %v384 = vrot.slane %v379, %v383
      %v386 = vadd.f32 %v377, %v384
      %v387 = vadd.f32 %v378, %v384
      %388 = vst.msk [vmem:[#allocation14] sm:$0xff] %vm105, %v386
      %389 = vst.msk [vmem:[#allocation14 + $0x8] sm:$0xff] %vm105, %v387
      %v390 = vld [vmem:[#allocation4] sm:$0xff]
      %v391 = vld [vmem:[#allocation4 + $0x8] sm:$0xff]
      %v392 = vld [vmem:[%s6] sm:$0x1]
      %v394 = vlaneseq
      %v395 = vshrl.u32 %v394, 7
      %v396 = vsub.s32 0, %v395
      %v397 = vrot.slane %v392, %v396
      %v399 = vadd.f32 %v390, %v397
      %v400 = vadd.f32 %v391, %v397
      %401 = vst.msk [vmem:[#allocation16] sm:$0xff] %vm105, %v399
      %402 = vst.msk [vmem:[#allocation16 + $0x8] sm:$0xff] %vm105, %v400
    $region53: #{tpu_custom_call.1} parent=1 // pred_fallthru
      _
    // Predicated region
    $region54: #{tpu_custom_call.1} parent=1 // pred_check
      _
    $region55: #{tpu_custom_call.1} parent=1 // pred_check_branch
      %404 = sbr.rel (0) target = $region57
    $region56: #{tpu_custom_call.1} parent=1 // pred_region
      %s406 = ssub.s32 256, 256
      %407 = vsyncadd [#allocation7], %s406
      %s408 = sshll.u32 [#allocation13], 4
      %s409 = int_to_ptr.vmem [resolvable:$true] %s408
      %414 = dma.vmem_to_hbm [thread:$0]  %s409, 256, %s7, [#allocation7], 128, 128, 8
    $region57: #{tpu_custom_call.1} parent=1 // pred_fallthru
      _
    // Predicated region
    $region58: #{tpu_custom_call.1} parent=1 // pred_check
      _
    $region59: #{tpu_custom_call.1} parent=1 // pred_check_branch
      %416 = sbr.rel (0) target = $region61
    $region60: #{tpu_custom_call.1} parent=1 // pred_region
      %s418 = ssub.s32 256, 256
      %419 = vsyncadd [#allocation15], %s418
      %s420 = sshll.u32 [#allocation14], 4
      %s421 = int_to_ptr.vmem [resolvable:$true] %s420
      %426 = dma.vmem_to_hbm [thread:$0]  %s421, 256, %s8, [#allocation15], 128, 128, 8
    $region61: #{tpu_custom_call.1} parent=1 // pred_fallthru
      _
    // Predicated region
    $region62: #{tpu_custom_call.1} parent=1 // pred_check
      _
    $region63: #{tpu_custom_call.1} parent=1 // pred_check_branch
      %428 = sbr.rel (0) target = $region65
    $region64: #{tpu_custom_call.1} parent=1 // pred_region
      %s430 = ssub.s32 256, 256
      %431 = vsyncadd [#allocation15], %s430
      %s432 = sshll.u32 [#allocation16], 4
      %s433 = int_to_ptr.vmem [resolvable:$true] %s432
      %438 = dma.vmem_to_hbm [thread:$0]  %s433, 256, %s9, [#allocation15], 128, 128, 8
    $region65: #{tpu_custom_call.1} parent=1 // pred_fallthru
      _
    // Predicated region
    $region66: #{tpu_custom_call.1} parent=1 // pred_check
      _
    $region67: #{tpu_custom_call.1} parent=1 // pred_check_branch
      %440 = sbr.rel (0) target = $region69
    $region68: #{tpu_custom_call.1} parent=1 // pred_region
      %441 = dma.done [#allocation7], 256
    $region69: #{tpu_custom_call.1} parent=1 // pred_fallthru
      _
    // Predicated region
    $region70: #{tpu_custom_call.1} parent=1 // pred_check
      _
    $region71: #{tpu_custom_call.1} parent=1 // pred_check_branch
      %443 = sbr.rel (0) target = $region73
    $region72: #{tpu_custom_call.1} parent=1 // pred_region
      %444 = dma.done [#allocation15], 256
    $region73: #{tpu_custom_call.1} parent=1 // pred_fallthru
      _
    // Predicated region
    $region74: #{tpu_custom_call.1} parent=1 // pred_check
      _
    $region75: #{tpu_custom_call.1} parent=1 // pred_check_branch
      %446 = sbr.rel (0) target = $region77
    $region76: #{tpu_custom_call.1} parent=1 // pred_region
      %447 = dma.done [#allocation15], 256
    $region77: #{tpu_custom_call.1} parent=1 // pred_fallthru
      _
    %448 = vsyncpa [#allocation6], 1
    %449 = vsyncpa [#allocation9], 1
    %450 = vsyncpa [#allocation12], 1
    %451 = vsyncpa [#allocation7], 1
    %452 = vsyncpa [#allocation15], 1

</llo_original>
